<compile_context>
chip_gen: v6e
topology: v6e:2x2x1
jax: 0.10.0
libtpu: 0.0.40
codegen_flags: <defaults>
</compile_context>

<pallas_src>
import functools

import jax
import jax.numpy as jnp
from jax.experimental import pallas as pl
from jax.experimental.pallas import tpu as pltpu

LN_EPS = 1e-5
_INV_SQRT2 = 0.7071067811865476
_SQRT_2_OVER_PI = 0.7978845608028654
_MIB = 1024 * 1024


def _round_up(n, m):
    return ((n + m - 1) // m) * m


def _chip_generation():
    """Best-effort TPU generation detection: 'v5e' | 'v6e' | 'v7x' | ''."""
    kind = ""
    try:
        kind = jax.devices()[0].device_kind.lower()
    except Exception:
        pass
    if "v7" in kind:
        return "v7x"
    if "v6" in kind:
        return "v6e"
    if "v5" in kind:
        return "v5e"
    return ""


def _vmem_capacity_bytes(gen):
    """Physical VMEM per core (trace-time query with conservative fallback)."""
    try:
        cap = getattr(pltpu.get_tpu_info(), "vmem_capacity_bytes", None)
        if cap:
            return int(cap)
    except Exception:
        pass
    if gen in ("v5e", "v6e"):
        return 128 * _MIB
    # v7x or unknown: assume the smallest-VMEM generation (64 MiB).
    return 64 * _MIB


def _default_row_tile(gen):
    # Weights are re-streamed per row tile -> arithmetic intensity ~ tm FLOP/B.
    # Roofline crossover: v6e ~650 FLOP/B, v7x ~310, v5e ~240.
    if gen == "v6e":
        return 768
    if gen == "v5e":
        return 256
    return 512  # v7x / unknown


def _mxu_alignment(gen):
    # v6e/v7x have a 2x256^2 MXU: prefer 256-aligned hidden chunks; v5e is
    # 4x128^2 so 128 alignment is enough.
    return 128 if gen == "v5e" else 256


def _auto_hidden_chunk(H, D, tm, in_itemsize, w_itemsize, vmem_budget, align,
                       weight_buffers):
    """Largest MXU-aligned divisor of H whose working set fits the VMEM budget."""
    # Fixed VMEM (independent of th): double-buffered x/out tiles, LN scratch,
    # f32 accumulator, LN affine + output bias blocks.
    fixed = (2 * tm * D * in_itemsize        # x tiles (2 buffers)
             + 2 * tm * D * in_itemsize      # out tiles (2 buffers)
             + tm * D * w_itemsize           # xn scratch (compute dtype)
             + tm * D * 4                    # f32 output accumulator
             + 8 * D * 4)                    # gamma / beta / b2 blocks
    # Per unit of th: the W1 / W2 chunk buffers plus the (tm, th) GELU
    # intermediate materialized in f32 + its cast copy for the 2nd matmul.
    per_th = (2 * weight_buffers * D * w_itemsize   # W1 + W2 chunk buffers
              + weight_buffers * 4                  # b1 chunk (f32)
              + tm * (4 + w_itemsize))              # h (f32) + cast for MXU
    avail = vmem_budget - fixed
    if avail <= 0:
        # Degenerate configuration (tm too large for this chip); smallest chunk.
        return H if H <= align else align if H % align == 0 else H
    cap = avail // per_th
    if cap >= H:
        return H
    for a in (align, 128):
        best = None
        d = a
        limit = min(H, cap)
        while d <= limit:
            if H % d == 0:
                best = d
            d += a
        if best is not None:
            return best
    # No aligned divisor fits the budget; fall back to the full hidden dim.
    return H


def ffn_kernel(x_ref, g_ref, beta_ref, w1_ref, b1_ref, w2_ref, b2_ref,
               o_ref, xn_ref, acc_ref, *, approx_gelu):
    # Grid: (row tiles, hidden chunks). Hidden axis is the reduction axis of
    # the second matmul; output / scratches are revisited across it.
    j = pl.program_id(1)
    nj = pl.num_programs(1)

    @pl.when(j == 0)
    def _():
        # LayerNorm over the last dim (biased variance, torch.nn.LayerNorm).
        x = x_ref[...].astype(jnp.float32)
        mean = jnp.mean(x, axis=-1, keepdims=True)
        var = jnp.mean((x - mean) ** 2, axis=-1, keepdims=True)
        xn = (x - mean) * jax.lax.rsqrt(var + LN_EPS)
        xn = xn * g_ref[...] + beta_ref[...]
        xn_ref[...] = xn.astype(xn_ref.dtype)          # bf16 (or f32) for MXU
        acc_ref[...] = jnp.zeros_like(acc_ref)

    # Linear(dim -> hidden chunk): bf16 (or f32) operands, f32 accumulation.
    h = jnp.dot(xn_ref[...], w1_ref[...], preferred_element_type=jnp.float32)
    h = h + b1_ref[...]

    if approx_gelu:
        # tanh approximation (single EUP tanh + a few VALU ops); use when the
        # VALU is the binding unit (narrow D). Not bit-parity with torch erf.
        c = jnp.float32(_SQRT_2_OVER_PI)
        h = 0.5 * h * (1.0 + jnp.tanh(c * (h + 0.044715 * h * h * h)))
    else:
        # Exact (erf) GELU — matches torch.nn.GELU() default.
        h = 0.5 * h * (1.0 + jax.lax.erf(h * jnp.float32(_INV_SQRT2)))

    # This hidden chunk's contribution to Linear(hidden -> dim).
    acc_ref[...] += jnp.dot(h.astype(w2_ref.dtype), w2_ref[...],
                            preferred_element_type=jnp.float32)

    @pl.when(j == nj - 1)
    def _():
        o_ref[...] = (acc_ref[...] + b2_ref[...]).astype(o_ref.dtype)
    # TODO(synk): Dropout(p>0) at train time would need pltpu.prng_seed /
    # prng_random_bits masking; with p=0 / eval it is identity and omitted.


def feedforward(x, gamma, beta, w1, b1, w2, b2, *, tm=None, th=None,
                use_bf16=True, approx_gelu=False, weight_buffers=2,
                vmem_limit_bytes=None):
    """x: (B, S, D) -> (B, S, D).

    tm: row tile (None = generation-aware: 256 v5e / 768 v6e / 512 v7x).
    th: hidden-dim chunk (None = auto-sized, MXU-aligned divisor of H derived
        from the VMEM budget; must divide H and be 128-aligned if given).
    use_bf16: cast matmul operands to bf16 (f32 accumulation preserved).
    approx_gelu: use tanh GELU instead of exact erf (VALU-bound small-D cases).
    weight_buffers: pipeline depth for W1/W2 chunks (2 default; try 3 if th is
        small and xprof shows exposed DMA between hidden chunks).
    vmem_limit_bytes: None = ~60% of detected physical VMEM.
    """
    B, S, D = x.shape
    H = w1.shape[1]
    N = B * S

    gen = _chip_generation()
    compute_dtype = jnp.bfloat16 if use_bf16 else jnp.float32
    w_itemsize = jnp.dtype(compute_dtype).itemsize
    in_itemsize = jnp.dtype(x.dtype).itemsize

    # Generation-aware VMEM budget (leave headroom for compiler scratch).
    if vmem_limit_bytes is None:
        vmem_limit_bytes = int(_vmem_capacity_bytes(gen) * 0.6)

    # Row tiling: 8-aligned tile, pad rows up to a tile multiple.
    if tm is None:
        tm = _default_row_tile(gen)
    tm_eff = min(tm, _round_up(N, 8))
    n_pad = _round_up(N, tm_eff)

    # v7x: keep the number of row tiles even so the "parallel" row axis splits
    # cleanly across the two TensorCores.
    if gen == "v7x":
        row_tiles = n_pad // tm_eff
        if row_tiles > 1 and row_tiles % 2 == 1:
            n_pad += tm_eff

    # Hidden tiling (reduction axis of the 2nd matmul): auto-size from the
    # VMEM budget, preferring 256 alignment on v6e/v7x, 128 on v5e.
    align = _mxu_alignment(gen)
    if th is None:
        th_eff = _auto_hidden_chunk(H, D, tm_eff, in_itemsize, w_itemsize,
                                    vmem_limit_bytes, align, weight_buffers)
    else:
        th_eff = th
    assert H % th_eff == 0, "hidden chunk must divide the hidden dim"
    assert th_eff == H or th_eff % 128 == 0, "hidden chunk must be 128-aligned"

    x2 = x.reshape(N, D)
    if n_pad != N:
        x2 = jnp.pad(x2, ((0, n_pad - N), (0, 0)))

    # Weights in the MXU compute dtype (halves DMA/VMEM when bf16);
    # biases / LN affine stay f32 and are applied after f32 accumulation.
    # (On v7x, fp8 weight storage would halve weight DMA again — not enabled.)
    w1c = w1.astype(compute_dtype)
    w2c = w2.astype(compute_dtype)
    g2 = gamma.reshape(1, D).astype(jnp.float32)
    be2 = beta.reshape(1, D).astype(jnp.float32)
    b1_2 = b1.reshape(1, H).astype(jnp.float32)
    b2_2 = b2.reshape(1, D).astype(jnp.float32)

    grid = (n_pad // tm_eff, H // th_eff)
    row_tiles = grid[0]

    # Weight-chunk specs; deeper buffering only when explicitly requested and
    # actually chunked (extra buffers cost one weight chunk of VMEM each).
    if weight_buffers != 2 and grid[1] > 1:
        w_mode = pl.Buffered(weight_buffers)
        w1_spec = pl.BlockSpec((D, th_eff), lambda i, j: (0, j),
                               pipeline_mode=w_mode)
        w2_spec = pl.BlockSpec((th_eff, D), lambda i, j: (j, 0),
                               pipeline_mode=w_mode)
    else:
        w1_spec = pl.BlockSpec((D, th_eff), lambda i, j: (0, j))
        w2_spec = pl.BlockSpec((th_eff, D), lambda i, j: (j, 0))

    # HBM traffic: x once, output once, W1/W2 re-streamed once per row tile.
    cost = pl.CostEstimate(
        flops=int(4 * n_pad * D * H),            # two (N,D,H) matmuls
        transcendentals=int(n_pad * H),          # erf/tanh in GELU
        bytes_accessed=int(
            n_pad * D * in_itemsize                    # x read
            + n_pad * D * in_itemsize                  # output write
            + row_tiles * 2 * D * H * w_itemsize       # W1 + W2 per row tile
            + row_tiles * (H + 3 * D) * 4),            # biases / LN affine
    )

    kernel = functools.partial(ffn_kernel, approx_gelu=approx_gelu)

    out2 = pl.pallas_call(
        kernel,
        out_shape=jax.ShapeDtypeStruct((n_pad, D), x.dtype),
        grid_spec=pltpu.PrefetchScalarGridSpec(
            num_scalar_prefetch=0,
            grid=grid,
            in_specs=[
                pl.BlockSpec((tm_eff, D), lambda i, j: (i, 0)),   # x rows
                pl.BlockSpec((1, D), lambda i, j: (0, 0)),        # gamma
                pl.BlockSpec((1, D), lambda i, j: (0, 0)),        # beta
                w1_spec,                                          # W1 chunk
                pl.BlockSpec((1, th_eff), lambda i, j: (0, j)),   # b1 chunk
                w2_spec,                                          # W2 chunk
                pl.BlockSpec((1, D), lambda i, j: (0, 0)),        # b2
            ],
            out_specs=pl.BlockSpec((tm_eff, D), lambda i, j: (i, 0)),
            scratch_shapes=[
                pltpu.VMEM((tm_eff, D), compute_dtype),   # normalized rows
                pltpu.VMEM((tm_eff, D), jnp.float32),     # output accumulator
            ],
        ),
        compiler_params=pltpu.CompilerParams(
            dimension_semantics=("parallel", "arbitrary"),
            vmem_limit_bytes=int(vmem_limit_bytes),
        ),
        cost_estimate=cost,
    )(x2, g2, be2, w1c, b1_2, w2c, b2_2)

    if n_pad != N:
        out2 = out2[:N]
    return out2.reshape(B, S, D)


def feedforward_ref(x, gamma, beta, w1, b1, w2, b2):
    x = x.astype(jnp.float32)
    mean = jnp.mean(x, axis=-1, keepdims=True)
    var = jnp.mean((x - mean) ** 2, axis=-1, keepdims=True)
    xn = (x - mean) / jnp.sqrt(var + LN_EPS) * gamma + beta
    h = xn @ w1 + b1
    h = 0.5 * h * (1.0 + jax.lax.erf(h / jnp.sqrt(2.0)))
    return h @ w2 + b2


def _make_params(key, dim, hidden):
    kw1, kb1, kw2, kb2 = jax.random.split(key, 4)
    gamma = jnp.ones((dim,), jnp.float32)
    beta = jnp.zeros((dim,), jnp.float32)
    w1 = jax.random.normal(kw1, (dim, hidden), jnp.float32) * 0.02
    b1 = jax.random.normal(kb1, (hidden,), jnp.float32) * 0.02
    w2 = jax.random.normal(kw2, (hidden, dim), jnp.float32) * 0.02
    b2 = jax.random.normal(kb2, (dim,), jnp.float32) * 0.02
    return gamma, beta, w1, b1, w2, b2


if __name__ == "__main__":
    key = jax.random.PRNGKey(0)
    k1, k2, kp1, kp2 = jax.random.split(key, 4)

    # Case 1: small shapes consistent with the module (mlp_ratio=4).
    B, S, dim = 2, 8, 32
    hidden = dim * 4
    x = jax.random.normal(k1, (B, S, dim), dtype=jnp.float32)
    params = _make_params(kp1, dim, hidden)
    ref = feedforward_ref(x, *params)

    out_f32 = jax.block_until_ready(feedforward(x, *params, use_bf16=False))
    assert out_f32.shape == (B, S, dim)
    assert jnp.allclose(out_f32, ref, atol=1e-4, rtol=1e-4)

    out_bf16 = jax.block_until_ready(feedforward(x, *params, use_bf16=True))
    assert out_bf16.shape == (B, S, dim)
    assert jnp.allclose(out_bf16, ref, atol=2e-2, rtol=2e-2)

    # Case 2: exercise the chunked-hidden reduction axis and row padding.
    B2, S2, dim2 = 2, 100, 128
    hidden2 = dim2 * 4
    x2 = jax.random.normal(k2, (B2, S2, dim2), dtype=jnp.float32)
    params2 = _make_params(kp2, dim2, hidden2)
    ref2 = feedforward_ref(x2, *params2)

    out2_f32 = jax.block_until_ready(
        feedforward(x2, *params2, use_bf16=False, tm=128, th=256))
    assert out2_f32.shape == (B2, S2, dim2)
    assert jnp.allclose(out2_f32, ref2, atol=1e-4, rtol=1e-4)

    out2_bf16 = jax.block_until_ready(
        feedforward(x2, *params2, use_bf16=True, tm=128, th=256))
    assert jnp.allclose(out2_bf16, ref2, atol=2e-2, rtol=2e-2)

    print("KERNEL_OK")
</pallas_src>

<mosaic_0001>
module attributes {stable_mosaic.version = 11 : i64} {
  func.func @ffn_kernel(%arg0: i32, %arg1: i32, %arg2: memref<16x32xf32, #tpu.memory_space<vmem>>, %arg3: memref<1x32xf32, #tpu.memory_space<vmem>>, %arg4: memref<1x32xf32, #tpu.memory_space<vmem>>, %arg5: memref<32x128xf32, #tpu.memory_space<vmem>>, %arg6: memref<1x128xf32, #tpu.memory_space<vmem>>, %arg7: memref<128x32xf32, #tpu.memory_space<vmem>>, %arg8: memref<1x32xf32, #tpu.memory_space<vmem>>, %arg9: memref<16x32xf32, #tpu.memory_space<vmem>>, %arg10: memref<16x32xf32, #tpu.memory_space<vmem>>, %arg11: memref<16x32xf32, #tpu.memory_space<vmem>>) attributes {dimension_semantics = [#tpu.dimension_semantics<parallel>, #tpu.dimension_semantics<arbitrary>], iteration_bounds = array<i64: 1, 1>, scalar_prefetch = 0 : i64, scratch_operands = 2 : i64, tpu.core_type = #tpu.core_type<tc>, window_params = [{transform_indices = @transform_0, window_bounds = array<i64: 16, 32>}, {pipeline_mode = #tpu.pipeline_mode<synchronous>, transform_indices = @transform_1, window_bounds = array<i64: 1, 32>}, {pipeline_mode = #tpu.pipeline_mode<synchronous>, transform_indices = @transform_2, window_bounds = array<i64: 1, 32>}, {transform_indices = @transform_3, window_bounds = array<i64: 32, 128>}, {transform_indices = @transform_4, window_bounds = array<i64: 1, 128>}, {transform_indices = @transform_5, window_bounds = array<i64: 128, 32>}, {pipeline_mode = #tpu.pipeline_mode<synchronous>, transform_indices = @transform_6, window_bounds = array<i64: 1, 32>}, {transform_indices = @transform_7, window_bounds = array<i64: 16, 32>}]} {
    %c0_i32 = arith.constant 0 : i32
    %0 = arith.cmpi eq, %arg1, %c0_i32 : i32
    %1 = arith.extui %0 : i1 to i32
    %c0_i32_0 = arith.constant 0 : i32
    %2 = arith.cmpi ne, %1, %c0_i32_0 : i32
    scf.if %2 {
      %c0_18 = arith.constant 0 : index
      %c0_19 = arith.constant 0 : index
      %25 = vector.load %arg2[%c0_18, %c0_19] : memref<16x32xf32, #tpu.memory_space<vmem>>, vector<16x32xf32>
      %cst_20 = arith.constant dense<0.000000e+00> : vector<16xf32>
      %26 = vector.multi_reduction <add>, %25, %cst_20 [1] : vector<16x32xf32> to vector<16xf32>
      %27 = vector.shape_cast %26 : vector<16xf32> to vector<16x1xf32>
      %cst_21 = arith.constant 3.200000e+01 : f32
      %28 = vector.broadcast %cst_21 : f32 to vector<16x1xf32>
      %29 = arith.divf %27, %28 : vector<16x1xf32>
      %30 = vector.broadcast %29 : vector<16x1xf32> to vector<16x32xf32>
      %31 = arith.subf %25, %30 : vector<16x32xf32>
      %32 = arith.mulf %31, %31 : vector<16x32xf32>
      %cst_22 = arith.constant dense<0.000000e+00> : vector<16xf32>
      %33 = vector.multi_reduction <add>, %32, %cst_22 [1] : vector<16x32xf32> to vector<16xf32>
      %34 = vector.shape_cast %33 : vector<16xf32> to vector<16x1xf32>
      %cst_23 = arith.constant 3.200000e+01 : f32
      %35 = vector.broadcast %cst_23 : f32 to vector<16x1xf32>
      %36 = arith.divf %34, %35 : vector<16x1xf32>
      %37 = vector.broadcast %29 : vector<16x1xf32> to vector<16x32xf32>
      %38 = arith.subf %25, %37 : vector<16x32xf32>
      %cst_24 = arith.constant 9.99999974E-6 : f32
      %39 = vector.broadcast %cst_24 : f32 to vector<16x1xf32>
      %40 = arith.addf %36, %39 : vector<16x1xf32>
      %41 = math.rsqrt %40 : vector<16x1xf32>
      %42 = vector.broadcast %41 : vector<16x1xf32> to vector<16x32xf32>
      %43 = arith.mulf %38, %42 : vector<16x32xf32>
      %c0_25 = arith.constant 0 : index
      %c0_26 = arith.constant 0 : index
      %44 = vector.load %arg3[%c0_25, %c0_26] : memref<1x32xf32, #tpu.memory_space<vmem>>, vector<1x32xf32>
      %45 = vector.broadcast %44 : vector<1x32xf32> to vector<16x32xf32>
      %46 = arith.mulf %43, %45 : vector<16x32xf32>
      %c0_27 = arith.constant 0 : index
      %c0_28 = arith.constant 0 : index
      %47 = vector.load %arg4[%c0_27, %c0_28] : memref<1x32xf32, #tpu.memory_space<vmem>>, vector<1x32xf32>
      %48 = vector.broadcast %47 : vector<1x32xf32> to vector<16x32xf32>
      %49 = arith.addf %46, %48 : vector<16x32xf32>
      %c0_29 = arith.constant 0 : index
      %c0_30 = arith.constant 0 : index
      %50 = vector.load %arg10[%c0_29, %c0_30] : memref<16x32xf32, #tpu.memory_space<vmem>>, vector<16x32xf32>
      tpu.vector_store %arg10[%c0_29, %c0_30], %49 {strides = array<i32>} : memref<16x32xf32, #tpu.memory_space<vmem>>, vector<16x32xf32>,
      %cst_31 = arith.constant 0.000000e+00 : f32
      %51 = vector.broadcast %cst_31 : f32 to vector<16x32xf32>
      %c0_32 = arith.constant 0 : index
      %c0_33 = arith.constant 0 : index
      %52 = vector.load %arg11[%c0_32, %c0_33] : memref<16x32xf32, #tpu.memory_space<vmem>>, vector<16x32xf32>
      tpu.vector_store %arg11[%c0_32, %c0_33], %51 {strides = array<i32>} : memref<16x32xf32, #tpu.memory_space<vmem>>, vector<16x32xf32>,
    } else {
    }
    %c0 = arith.constant 0 : index
    %c0_1 = arith.constant 0 : index
    %3 = vector.load %arg10[%c0, %c0_1] : memref<16x32xf32, #tpu.memory_space<vmem>>, vector<16x32xf32>
    %c0_2 = arith.constant 0 : index
    %c0_3 = arith.constant 0 : index
    %4 = vector.load %arg5[%c0_2, %c0_3] : memref<32x128xf32, #tpu.memory_space<vmem>>, vector<32x128xf32>
    %cst = arith.constant dense<0.000000e+00> : vector<16x128xf32>
    %5 = tpu.matmul %3, %4, %cst {dimension_numbers = #tpu.dot_dimension_numbers<[1], [0], [0], [1], [0, 0, 1, 1], [], []>} : vector<16x32xf32>, vector<32x128xf32>, vector<16x128xf32> -> vector<16x128xf32>
    %c0_4 = arith.constant 0 : index
    %c0_5 = arith.constant 0 : index
    %6 = vector.load %arg6[%c0_4, %c0_5] : memref<1x128xf32, #tpu.memory_space<vmem>>, vector<1x128xf32>
    %7 = vector.broadcast %6 : vector<1x128xf32> to vector<16x128xf32>
    %8 = arith.addf %5, %7 : vector<16x128xf32>
    %cst_6 = arith.constant 5.000000e-01 : f32
    %9 = vector.broadcast %cst_6 : f32 to vector<16x128xf32>
    %10 = arith.mulf %9, %8 : vector<16x128xf32>
    %cst_7 = arith.constant 0.707106769 : f32
    %11 = vector.broadcast %cst_7 : f32 to vector<16x128xf32>
    %12 = arith.mulf %8, %11 : vector<16x128xf32>
    %13 = math.erf %12 : vector<16x128xf32>
    %cst_8 = arith.constant 1.000000e+00 : f32
    %14 = vector.broadcast %cst_8 : f32 to vector<16x128xf32>
    %15 = arith.addf %14, %13 : vector<16x128xf32>
    %16 = arith.mulf %10, %15 : vector<16x128xf32>
    %c0_9 = arith.constant 0 : index
    %c0_10 = arith.constant 0 : index
    %17 = vector.load %arg11[%c0_9, %c0_10] : memref<16x32xf32, #tpu.memory_space<vmem>>, vector<16x32xf32>
    %c0_11 = arith.constant 0 : index
    %c0_12 = arith.constant 0 : index
    %18 = vector.load %arg7[%c0_11, %c0_12] : memref<128x32xf32, #tpu.memory_space<vmem>>, vector<128x32xf32>
    %cst_13 = arith.constant dense<0.000000e+00> : vector<16x32xf32>
    %19 = tpu.matmul %16, %18, %cst_13 {dimension_numbers = #tpu.dot_dimension_numbers<[1], [0], [0], [1], [0, 0, 1, 1], [], []>} : vector<16x128xf32>, vector<128x32xf32>, vector<16x32xf32> -> vector<16x32xf32>
    %20 = arith.addf %17, %19 : vector<16x32xf32>
    %c0_14 = arith.constant 0 : index
    %c0_15 = arith.constant 0 : index
    %21 = vector.load %arg11[%c0_14, %c0_15] : memref<16x32xf32, #tpu.memory_space<vmem>>, vector<16x32xf32>
    tpu.vector_store %arg11[%c0_14, %c0_15], %20 {strides = array<i32>} : memref<16x32xf32, #tpu.memory_space<vmem>>, vector<16x32xf32>,
    %c0_i32_16 = arith.constant 0 : i32
    %22 = arith.cmpi eq, %arg1, %c0_i32_16 : i32
    %23 = arith.extui %22 : i1 to i32
    %c0_i32_17 = arith.constant 0 : i32
    %24 = arith.cmpi ne, %23, %c0_i32_17 : i32
    scf.if %24 {
      %c0_18 = arith.constant 0 : index
      %c0_19 = arith.constant 0 : index
      %25 = vector.load %arg11[%c0_18, %c0_19] : memref<16x32xf32, #tpu.memory_space<vmem>>, vector<16x32xf32>
      %c0_20 = arith.constant 0 : index
      %c0_21 = arith.constant 0 : index
      %26 = vector.load %arg8[%c0_20, %c0_21] : memref<1x32xf32, #tpu.memory_space<vmem>>, vector<1x32xf32>
      %27 = vector.broadcast %26 : vector<1x32xf32> to vector<16x32xf32>
      %28 = arith.addf %25, %27 : vector<16x32xf32>
      %c0_22 = arith.constant 0 : index
      %c0_23 = arith.constant 0 : index
      %29 = vector.load %arg9[%c0_22, %c0_23] : memref<16x32xf32, #tpu.memory_space<vmem>>, vector<16x32xf32>
      tpu.vector_store %arg9[%c0_22, %c0_23], %28 {strides = array<i32>} : memref<16x32xf32, #tpu.memory_space<vmem>>, vector<16x32xf32>,
    } else {
    }
    return
  }
  func.func @transform_0(%arg0: i32, %arg1: i32) -> (i32, i32) {
    %c0_i32 = arith.constant 0 : i32
    %c0_i32_0 = arith.constant 0 : i32
    return %arg0, %c0_i32 : i32, i32
  }
  func.func @transform_1(%arg0: i32, %arg1: i32) -> (i32, i32) {
    %c0_i32 = arith.constant 0 : i32
    %c0_i32_0 = arith.constant 0 : i32
    %c0_i32_1 = arith.constant 0 : i32
    return %c0_i32, %c0_i32_0 : i32, i32
  }
  func.func @transform_2(%arg0: i32, %arg1: i32) -> (i32, i32) {
    %c0_i32 = arith.constant 0 : i32
    %c0_i32_0 = arith.constant 0 : i32
    %c0_i32_1 = arith.constant 0 : i32
    return %c0_i32, %c0_i32_0 : i32, i32
  }
  func.func @transform_3(%arg0: i32, %arg1: i32) -> (i32, i32) {
    %c0_i32 = arith.constant 0 : i32
    %c0_i32_0 = arith.constant 0 : i32
    return %c0_i32, %arg1 : i32, i32
  }
  func.func @transform_4(%arg0: i32, %arg1: i32) -> (i32, i32) {
    %c0_i32 = arith.constant 0 : i32
    %c0_i32_0 = arith.constant 0 : i32
    return %c0_i32, %arg1 : i32, i32
  }
  func.func @transform_5(%arg0: i32, %arg1: i32) -> (i32, i32) {
    %c0_i32 = arith.constant 0 : i32
    %c0_i32_0 = arith.constant 0 : i32
    return %arg1, %c0_i32 : i32, i32
  }
  func.func @transform_6(%arg0: i32, %arg1: i32) -> (i32, i32) {
    %c0_i32 = arith.constant 0 : i32
    %c0_i32_0 = arith.constant 0 : i32
    %c0_i32_1 = arith.constant 0 : i32
    return %c0_i32, %c0_i32_0 : i32, i32
  }
  func.func @transform_7(%arg0: i32, %arg1: i32) -> (i32, i32) {
    %c0_i32 = arith.constant 0 : i32
    %c0_i32_0 = arith.constant 0 : i32
    return %arg0, %c0_i32 : i32, i32
  }
}

</mosaic_0001>

<llo_original>
// kernel: tpu_custom_call.1
$region0: #{tpu_custom_call.1}
  #allocation0 [shape = 'u32[]', space=smem, size = 0x4, offset = 0x4, fixed_abs, tag = 'smem constant byte address 0x4 - core index']
  #allocation1 [shape = 'u32[144,128]{1,0:T(1,128)}', space=vmem, size = 0x12000, scoped, tag = 'internal scratch']
  #allocation2 [shape = 'f32[16,32]{1,0:T(8,128)}', space=vmem, size = 0x2000, scoped, tag = 'scratch operand']
  #allocation3 [shape = 'f32[16,32]{1,0:T(8,128)}', space=vmem, size = 0x2000, scoped, tag = 'scratch operand']
  %s0 = inlined_call_operand.vmem [shape: f32[16,32], index: 0, kind: input, shape index: {}]
  %s1 = inlined_call_operand.vmem [shape: f32[1,32], index: 1, kind: input, shape index: {}]
  %s2 = inlined_call_operand.vmem [shape: f32[1,32], index: 2, kind: input, shape index: {}]
  %s3 = inlined_call_operand.vmem [shape: f32[32,128], index: 3, kind: input, shape index: {}]
  %s4 = inlined_call_operand.vmem [shape: f32[1,128], index: 4, kind: input, shape index: {}]
  %s5 = inlined_call_operand.vmem [shape: f32[128,32], index: 5, kind: input, shape index: {}]
  %s6 = inlined_call_operand.vmem [shape: f32[1,32], index: 6, kind: input, shape index: {}]
  %s7 = inlined_call_operand.hbm [shape: f32[16,32], index: 7, kind: output, shape index: {}]
  %s8 = sld [smem:[#allocation0]]
  $region46: #{tpu_custom_call.1} parent=0
    _
  %s10 = ssub.s32 1, %s8
  %s11 = scalar_select 0, %s10, %s8
  $region1: #{tpu_custom_call.1} parent=0
    #allocation4 [shape = 'u8[8192]{0}', space=vmem, size = 0x2000, scoped, tag = 'output window, operand 0, single buffered']
    #allocation5 [shape = 's32[1]{0}', space=sflag, size = 0x4, scoped, tag = 'scoped memory for tpu_custom_call.1']
    %12 = vsyncpa [#allocation5], 0
    // Predicated region
    $region2: #{tpu_custom_call.1} parent=1 // pred_check
      _
    $region3: #{tpu_custom_call.1} parent=1 // pred_check_branch
      %14 = sbr.rel (0) target = $region5
    $region4: #{tpu_custom_call.1} parent=1 // pred_region
      _
    $region5: #{tpu_custom_call.1} parent=1 // pred_fallthru
      _
    // Predicated region
    $region6: #{tpu_custom_call.1} parent=1 // pred_check
      _
    $region7: #{tpu_custom_call.1} parent=1 // pred_check_branch
      %16 = sbr.rel (0) target = $region9
    $region8: #{tpu_custom_call.1} parent=1 // pred_region
      _
    $region9: #{tpu_custom_call.1} parent=1 // pred_fallthru
      _
    // Predicated region
    $region10: #{tpu_custom_call.1} parent=1 // pred_check
      _
    $region11: #{tpu_custom_call.1} parent=1 // pred_check_branch
      %18 = sbr.rel (0) target = $region13
    $region12: #{tpu_custom_call.1} parent=1 // pred_region
      _
    $region13: #{tpu_custom_call.1} parent=1 // pred_fallthru
      _
    // Predicated region
    $region14: #{tpu_custom_call.1} parent=1 // pred_check
      _
    $region15: #{tpu_custom_call.1} parent=1 // pred_check_branch
      %20 = sbr.rel (0) target = $region17
    $region16: #{tpu_custom_call.1} parent=1 // pred_region
      _
    $region17: #{tpu_custom_call.1} parent=1 // pred_fallthru
      _
    // Predicated region
    $region18: #{tpu_custom_call.1} parent=1 // pred_check
      _
    $region19: #{tpu_custom_call.1} parent=1 // pred_check_branch
      %22 = sbr.rel (0) target = $region21
    $region20: #{tpu_custom_call.1} parent=1 // pred_region
      _
    $region21: #{tpu_custom_call.1} parent=1 // pred_fallthru
      _
    // Predicated region
    $region22: #{tpu_custom_call.1} parent=1 // pred_check
      _
    $region23: #{tpu_custom_call.1} parent=1 // pred_check_branch
      %24 = sbr.rel (0) target = $region25
    $region24: #{tpu_custom_call.1} parent=1 // pred_region
      _
    $region25: #{tpu_custom_call.1} parent=1 // pred_fallthru
      _
    // Predicated region
    $region26: #{tpu_custom_call.1} parent=1 // pred_check
      _
    $region27: #{tpu_custom_call.1} parent=1 // pred_check_branch
      %26 = sbr.rel (0) target = $region29
    $region28: #{tpu_custom_call.1} parent=1 // pred_region
      _
    $region29: #{tpu_custom_call.1} parent=1 // pred_fallthru
      _
    %p27 = scmp.eq.s32.totalorder 0, 0
    // Predicated region
    $region30: #{tpu_custom_call.1} parent=1 // pred_check
      %p28 = pneg %p27
    $region31: #{tpu_custom_call.1} parent=1 // pred_check_branch
      %30 = sbr.rel (%p28) target = $region33
    $region32: #{tpu_custom_call.1} parent=1 // pred_region
      %v31 = vld [vmem:[%s0] sm:$0xff]
      %v32 = vld [vmem:[%s0 + $0x8] sm:$0xff]
      %vm33 = vcmask 261120
      %v34 = vsel %vm33, %v31, 0.0
      %35 = vadd.xlane.f32.xlu0 %v34
      %v36 = vpop.xlane.xlu0 %35
      %v37 = vsel %vm33, %v32, 0.0
      %38 = vadd.xlane.f32.xlu0 %v37
      %v39 = vpop.xlane.xlu0 %38
      %v40 = vrcp.pop 32.0
      %v41 = vmul.f32 %v36, %v40
      %v42 = vmul.f32 %v39, %v40
      %v43 = vsub.f32 %v31, %v41
      %v44 = vsub.f32 %v32, %v42
      %v45 = vmul.f32 %v43, %v43
      %v46 = vmul.f32 %v44, %v44
      %v47 = vsel %vm33, %v45, 0.0
      %48 = vadd.xlane.f32.xlu0 %v47
      %v49 = vpop.xlane.xlu0 %48
      %v50 = vsel %vm33, %v46, 0.0
      %51 = vadd.xlane.f32.xlu0 %v50
      %v52 = vpop.xlane.xlu0 %51
      %v53 = vmul.f32 %v49, %v40
      %v54 = vmul.f32 %v52, %v40
      %v55 = vadd.f32 %v53, 1e-05
      %v56 = vadd.f32 %v54, 1e-05
      %v57 = vrsqrt.pop %v55
      %v58 = vrsqrt.pop %v56
      %v59 = vmul.f32 %v43, %v57
      %v60 = vmul.f32 %v44, %v58
      %v61 = vld [vmem:[%s1] sm:$0x1]
      %v63 = vlaneseq
      %v64 = vshrl.u32 %v63, 7
      %v65 = vsub.s32 0, %v64
      %v66 = vrot.slane %v61, %v65
      %v68 = vmul.f32 %v59, %v66
      %v69 = vmul.f32 %v60, %v66
      %v70 = vld [vmem:[%s2] sm:$0x1]
      %v72 = vlaneseq
      %v73 = vshrl.u32 %v72, 7
      %v74 = vsub.s32 0, %v73
      %v75 = vrot.slane %v70, %v74
      %v77 = vadd.f32 %v68, %v75
      %v78 = vadd.f32 %v69, %v75
      %79 = vst.msk [vmem:[#allocation2] sm:$0xff] %vm33, %v77
      %80 = vst.msk [vmem:[#allocation2 + $0x8] sm:$0xff] %vm33, %v78
      %81 = vst.msk [vmem:[#allocation3] sm:$0xff] %vm33, 0.0
      %82 = vst.msk [vmem:[#allocation3 + $0x8] sm:$0xff] %vm33, 0.0
    $region33: #{tpu_custom_call.1} parent=1 // pred_fallthru
      _
    %v83 = vld [vmem:[#allocation2] sm:$0xff]
    %v84 = vld [vmem:[#allocation2 + $0x8] sm:$0xff]
    %v85 = vld [vmem:[%s3] sm:$0xff]
    %v86 = vld [vmem:[%s3 + $0x8] sm:$0xff]
    %v87 = vld [vmem:[%s3 + $0x10] sm:$0xff]
    %v88 = vld [vmem:[%s3 + $0x18] sm:$0xff]
    %v89 = vld [vmem:[%s4] sm:$0x1]
    %v91 = vlaneseq
    %v92 = vshrl.u32 %v91, 7
    %v93 = vsub.s32 0, %v92
    %v94 = vrot.slane %v89, %v93
    %vm96 = vcmask 261120
    %v98 = vsel %vm96, %v83, 0
    %v101 = vsel %vm96, %v84, 0
    %103 = vmatprep.subr.mxu0 0.0
    %104 = vmatpush1.msra.mxu0 0.0
    %105 = vmatprep.subr.mxu0 0.0
    %106 = vmatpush1.msra.mxu0 0.0
    %107 = vmatprep.subr.mxu0 0.0
    %108 = vmatpush1.msra.mxu0 0.0
    %109 = vmatprep.subr.mxu0 0.0
    %110 = vmatpush1.msra.mxu0 0.0
    %111 = vmatprep.subr.mxu0 0.0
    %112 = vmatpush1.msra.mxu0 0.0
    %113 = vmatprep.subr.mxu0 0.0
    %114 = vmatpush1.msra.mxu0 0.0
    %115 = vmatprep.subr.mxu0 0.0
    %116 = vmatpush1.msra.mxu0 0.0
    %117 = vmatprep.subr.mxu0 0.0
    %118 = vmatpush1.msra.mxu0 0.0
    %119 = vmatprep.subr.mxu0 0.0
    %120 = vmatpush1.msra.mxu0 0.0
    %121 = vmatprep.subr.mxu0 0.0
    %122 = vmatpush1.msra.mxu0 0.0
    %123 = vmatprep.subr.mxu0 0.0
    %124 = vmatpush1.msra.mxu0 0.0
    %125 = vmatprep.subr.mxu0 0.0
    %126 = vmatpush1.msra.mxu0 0.0
    %127 = vmatprep.subr.mxu0 0.0
    %128 = vmatpush1.msra.mxu0 %v88
    %129 = vmatprep.subr.mxu0 0.0
    %130 = vmatpush1.msra.mxu0 %v87
    %131 = vmatprep.subr.mxu0 0.0
    %132 = vmatpush1.msra.mxu0 %v86
    %133 = vmatprep.subr.mxu0 0.0
    %134 = vmatpush1.msra.mxu0 %v85
    %135 = vmatprep.subr.mxu0 0.0
    %136 = vmatpush2.msra.mxu0 0.0
    %137 = vmatprep.subr.mxu0 0.0
    %138 = vmatpush2.msra.mxu0 0.0
    %139 = vmatprep.subr.mxu0 0.0
    %140 = vmatpush2.msra.mxu0 0.0
    %141 = vmatprep.subr.mxu0 0.0
    %142 = vmatpush2.msra.mxu0 0.0
    %143 = vmatprep.subr.mxu0 0.0
    %144 = vmatpush2.msra.mxu0 0.0
    %145 = vmatprep.subr.mxu0 0.0
    %146 = vmatpush2.msra.mxu0 0.0
    %147 = vmatprep.subr.mxu0 0.0
    %148 = vmatpush2.msra.mxu0 0.0
    %149 = vmatprep.subr.mxu0 0.0
    %150 = vmatpush2.msra.mxu0 0.0
    %151 = vmatprep.subr.mxu0 0.0
    %152 = vmatpush2.msra.mxu0 0.0
    %153 = vmatprep.subr.mxu0 0.0
    %154 = vmatpush2.msra.mxu0 0.0
    %155 = vmatprep.subr.mxu0 0.0
    %156 = vmatpush2.msra.mxu0 0.0
    %157 = vmatprep.subr.mxu0 0.0
    %158 = vmatpush2.msra.mxu0 0.0
    %159 = vmatprep.subr.mxu0 0.0
    %160 = vmatpush2.msra.mxu0 0.0
    %161 = vmatprep.subr.mxu0 0.0
    %162 = vmatpush2.msra.mxu0 0.0
    %163 = vmatprep.subr.mxu0 0.0
    %164 = vmatpush2.msra.mxu0 0.0
    %165 = vmatprep.subr.mxu0 0.0
    %166 = vmatpush2.msra.mxu0 0.0
    %167 = vmatprep.mubr.f32.mxu0 0.0
    %168 = vmatmul.mubr.f32.gmra.mxu0 %v98
    %v169 = vpop.f32.mrf.mxu0
    %v170 = vadd.f32 %v94, %v169
    %v171 = vpop.f32.mrf.mxu0
    %172 = vmatprep.mubr.f32.mxu0 0.0
    %173 = vmatmul.mubr.f32.gmra.mxu0 %v101
    %v174 = vpop.f32.mrf.mxu0
    %v175 = vadd.f32 %v94, %v174
    %v176 = vpop.f32.mrf.mxu0
    %177 = vdwg.mxu0
    %v178 = vmul.f32 %v170, 0.5
    %v179 = vmul.f32 %v175, 0.5
    %v180 = vmul.f32 %v170, 0.70710677
    %v181 = vmul.f32 %v175, 0.70710677
    %v182 = verf.f32.pop %v180
    %v183 = verf.f32.pop %v181
    %v184 = vadd.f32 %v182, 1.0
    %v185 = vadd.f32 %v183, 1.0
    %v186 = vmul.f32 %v178, %v184
    %v187 = vmul.f32 %v179, %v185
    %v188 = vld [vmem:[#allocation3] sm:$0xff]
    %v189 = vld [vmem:[#allocation3 + $0x8] sm:$0xff]
    %v190 = vld [vmem:[%s5] sm:$0xff]
    %v191 = vld [vmem:[%s5 + $0x8] sm:$0xff]
    %v192 = vld [vmem:[%s5 + $0x10] sm:$0xff]
    %v193 = vld [vmem:[%s5 + $0x18] sm:$0xff]
    %v194 = vld [vmem:[%s5 + $0x20] sm:$0xff]
    %v195 = vld [vmem:[%s5 + $0x28] sm:$0xff]
    %v196 = vld [vmem:[%s5 + $0x30] sm:$0xff]
    %v197 = vld [vmem:[%s5 + $0x38] sm:$0xff]
    %v198 = vld [vmem:[%s5 + $0x40] sm:$0xff]
    %v199 = vld [vmem:[%s5 + $0x48] sm:$0xff]
    %v200 = vld [vmem:[%s5 + $0x50] sm:$0xff]
    %v201 = vld [vmem:[%s5 + $0x58] sm:$0xff]
    %v202 = vld [vmem:[%s5 + $0x60] sm:$0xff]
    %v203 = vld [vmem:[%s5 + $0x68] sm:$0xff]
    %v204 = vld [vmem:[%s5 + $0x70] sm:$0xff]
    %v205 = vld [vmem:[%s5 + $0x78] sm:$0xff]
    %206 = vmatprep.subr.mxu0 0.0
    %207 = vmatpush1.msra.mxu0 %v205
    %208 = vmatprep.subr.mxu0 0.0
    %209 = vmatpush1.msra.mxu0 %v204
    %210 = vmatprep.subr.mxu0 0.0
    %211 = vmatpush1.msra.mxu0 %v203
    %212 = vmatprep.subr.mxu0 0.0
    %213 = vmatpush1.msra.mxu0 %v202
    %214 = vmatprep.subr.mxu0 0.0
    %215 = vmatpush1.msra.mxu0 %v201
    %216 = vmatprep.subr.mxu0 0.0
    %217 = vmatpush1.msra.mxu0 %v200
    %218 = vmatprep.subr.mxu0 0.0
    %219 = vmatpush1.msra.mxu0 %v199
    %220 = vmatprep.subr.mxu0 0.0
    %221 = vmatpush1.msra.mxu0 %v198
    %222 = vmatprep.subr.mxu0 0.0
    %223 = vmatpush1.msra.mxu0 %v197
    %224 = vmatprep.subr.mxu0 0.0
    %225 = vmatpush1.msra.mxu0 %v196
    %226 = vmatprep.subr.mxu0 0.0
    %227 = vmatpush1.msra.mxu0 %v195
    %228 = vmatprep.subr.mxu0 0.0
    %229 = vmatpush1.msra.mxu0 %v194
    %230 = vmatprep.subr.mxu0 0.0
    %231 = vmatpush1.msra.mxu0 %v193
    %232 = vmatprep.subr.mxu0 0.0
    %233 = vmatpush1.msra.mxu0 %v192
    %234 = vmatprep.subr.mxu0 0.0
    %235 = vmatpush1.msra.mxu0 %v191
    %236 = vmatprep.subr.mxu0 0.0
    %237 = vmatpush1.msra.mxu0 %v190
    %238 = vmatprep.subr.mxu0 0.0
    %239 = vmatpush2.msra.mxu0 0.0
    %240 = vmatprep.subr.mxu0 0.0
    %241 = vmatpush2.msra.mxu0 0.0
    %242 = vmatprep.subr.mxu0 0.0
    %243 = vmatpush2.msra.mxu0 0.0
    %244 = vmatprep.subr.mxu0 0.0
    %245 = vmatpush2.msra.mxu0 0.0
    %246 = vmatprep.subr.mxu0 0.0
    %247 = vmatpush2.msra.mxu0 0.0
    %248 = vmatprep.subr.mxu0 0.0
    %249 = vmatpush2.msra.mxu0 0.0
    %250 = vmatprep.subr.mxu0 0.0
    %251 = vmatpush2.msra.mxu0 0.0
    %252 = vmatprep.subr.mxu0 0.0
    %253 = vmatpush2.msra.mxu0 0.0
    %254 = vmatprep.subr.mxu0 0.0
    %255 = vmatpush2.msra.mxu0 0.0
    %256 = vmatprep.subr.mxu0 0.0
    %257 = vmatpush2.msra.mxu0 0.0
    %258 = vmatprep.subr.mxu0 0.0
    %259 = vmatpush2.msra.mxu0 0.0
    %260 = vmatprep.subr.mxu0 0.0
    %261 = vmatpush2.msra.mxu0 0.0
    %262 = vmatprep.subr.mxu0 0.0
    %263 = vmatpush2.msra.mxu0 0.0
    %264 = vmatprep.subr.mxu0 0.0
    %265 = vmatpush2.msra.mxu0 0.0
    %266 = vmatprep.subr.mxu0 0.0
    %267 = vmatpush2.msra.mxu0 0.0
    %268 = vmatprep.subr.mxu0 0.0
    %269 = vmatpush2.msra.mxu0 0.0
    %270 = vmatprep.mubr.f32.mxu0 0.0
    %271 = vmatmul.mubr.f32.gmra.mxu0 %v186
    %v272 = vpop.f32.mrf.mxu0
    %v273 = vadd.f32 0.0, %v272
    %v274 = vpop.f32.mrf.mxu0
    %275 = vmatprep.mubr.f32.mxu0 0.0
    %276 = vmatmul.mubr.f32.gmra.mxu0 %v187
    %v277 = vpop.f32.mrf.mxu0
    %v278 = vadd.f32 0.0, %v277
    %v279 = vpop.f32.mrf.mxu0
    %280 = vdwg.mxu0
    %v281 = vadd.f32 %v188, %v273
    %v282 = vadd.f32 %v189, %v278
    %283 = vst.msk [vmem:[#allocation3] sm:$0xff] %vm96, %v281
    %284 = vst.msk [vmem:[#allocation3 + $0x8] sm:$0xff] %vm96, %v282
    // Predicated region
    $region34: #{tpu_custom_call.1} parent=1 // pred_check
      %p285 = pneg %p27
    $region35: #{tpu_custom_call.1} parent=1 // pred_check_branch
      %287 = sbr.rel (%p285) target = $region37
    $region36: #{tpu_custom_call.1} parent=1 // pred_region
      %v288 = vld [vmem:[#allocation3] sm:$0xff]
      %v289 = vld [vmem:[#allocation3 + $0x8] sm:$0xff]
      %v290 = vld [vmem:[%s6] sm:$0x1]
      %v292 = vlaneseq
      %v293 = vshrl.u32 %v292, 7
      %v294 = vsub.s32 0, %v293
      %v295 = vrot.slane %v290, %v294
      %v297 = vadd.f32 %v288, %v295
      %v298 = vadd.f32 %v289, %v295
      %299 = vst.msk [vmem:[#allocation4] sm:$0xff] %vm96, %v297
      %300 = vst.msk [vmem:[#allocation4 + $0x8] sm:$0xff] %vm96, %v298
    $region37: #{tpu_custom_call.1} parent=1 // pred_fallthru
      _
    // Predicated region
    $region38: #{tpu_custom_call.1} parent=1 // pred_check
      _
    $region39: #{tpu_custom_call.1} parent=1 // pred_check_branch
      %302 = sbr.rel (0) target = $region41
    $region40: #{tpu_custom_call.1} parent=1 // pred_region
      %s304 = ssub.s32 256, 256
      %305 = vsyncadd [#allocation5], %s304
      %s306 = sshll.u32 [#allocation4], 4
      %s307 = int_to_ptr.vmem [resolvable:$true] %s306
      %312 = dma.vmem_to_hbm [thread:$0]  %s307, 256, %s7, [#allocation5], 128, 128, 8
    $region41: #{tpu_custom_call.1} parent=1 // pred_fallthru
      _
    // Predicated region
    $region42: #{tpu_custom_call.1} parent=1 // pred_check
      _
    $region43: #{tpu_custom_call.1} parent=1 // pred_check_branch
      %314 = sbr.rel (0) target = $region45
    $region44: #{tpu_custom_call.1} parent=1 // pred_region
      %315 = dma.done [#allocation5], 256
    $region45: #{tpu_custom_call.1} parent=1 // pred_fallthru
      _
    %316 = vsyncpa [#allocation5], 1

</llo_original>
